<compile_context>
chip_gen: v6e
topology: v6e:2x2x1
jax: 0.10.0
libtpu: 0.0.40
codegen_flags: <defaults>
</compile_context>

<pallas_src>
import jax
import jax.numpy as jnp
from jax import lax
from jax.experimental import pallas as pl
from jax.experimental.pallas import tpu as pltpu

_LANE = 128
_SUBLANE = 8
_SUBLANE_PACK = 32        # multiple of 32 keeps f32/bf16/int8 packed vreg tiling unmasked
_MIN_GRID_STEPS = 4       # >=2 feeds both v7x TensorCores; 4 keeps the pipeline busy
_SMALL_N = 1 << 14        # ragged inputs up to this size run as one full-extent block


def _log_kernel(x_ref, o_ref):
    # Elementwise natural log on the whole VMEM tile (EUP transcendental path).
    o_ref[...] = jnp.log(x_ref[...])


def _log_slab(x2d: jax.Array, target_block_bytes: int) -> jax.Array:
    """Tiled elementwise log over a 2-D slab (rows, width); lane dim never tiled."""
    rows, width = x2d.shape
    itemsize = jnp.dtype(x2d.dtype).itemsize

    # Rows per block from the byte budget, rounded to the packed-sublane quantum.
    budget_rows = max(
        _SUBLANE_PACK,
        (target_block_bytes // (width * itemsize)) // _SUBLANE_PACK * _SUBLANE_PACK,
    )

    # Guarantee a multi-step grid when the slab is splittable (v7x megacore +
    # pipelining); small slabs fall back to a single full-extent block, which
    # is always a legal block shape.
    if rows >= _MIN_GRID_STEPS * _SUBLANE_PACK:
        cap = max(_SUBLANE_PACK,
                  (rows // _MIN_GRID_STEPS) // _SUBLANE_PACK * _SUBLANE_PACK)
        tile_rows = min(budget_rows, cap)
    elif rows >= 2 * _SUBLANE:
        cap = max(_SUBLANE, (rows // 2) // _SUBLANE * _SUBLANE)
        tile_rows = min(budget_rows, cap)
    else:
        tile_rows = rows

    grid = (pl.cdiv(rows, tile_rows),)        # ragged last block is auto-masked

    # Live VMEM = 2 buffers x (input + output) x block; request that plus
    # margin, capped well under v7x's 64 MiB physical per-TC VMEM (also raises
    # v5e's 16 MiB scoped default).
    block_bytes = tile_rows * width * itemsize
    vmem_limit = min(48 * 1024 * 1024,
                     max(16 * 1024 * 1024, 4 * block_bytes + 8 * 1024 * 1024))

    return pl.pallas_call(
        _log_kernel,
        out_shape=jax.ShapeDtypeStruct((rows, width), x2d.dtype),
        grid=grid,
        in_specs=[pl.BlockSpec((tile_rows, width), lambda i: (i, 0))],
        out_specs=pl.BlockSpec((tile_rows, width), lambda i: (i, 0)),
        compiler_params=pltpu.CompilerParams(
            dimension_semantics=("parallel",),   # megacore / 2-TC sharding on v7x
            vmem_limit_bytes=vmem_limit,
        ),
    )(x2d)


def log_layer(x: jax.Array, *, target_block_bytes: int = 8 * 1024 * 1024) -> jax.Array:
    """Elementwise natural log matching torch.log(x) semantics, any shape."""
    orig_shape = x.shape

    # torch.log promotes integer / bool inputs to the default float dtype.
    if not jnp.issubdtype(x.dtype, jnp.floating):
        x = x.astype(jnp.float32)

    n = x.size
    if n == 0:
        return jnp.reshape(x, orig_shape)

    x_flat = jnp.reshape(x, (-1,))             # contiguous reshape: free, no copy

    if n % _LANE == 0:
        # Aligned: free reshape into the widest lane-dense slab (long unmasked
        # vst streams; matters most on v5e's single store slot). No pad/slice.
        width = next(w for w in (2048, 1024, 512, 256, 128) if n % w == 0)
        out2d = _log_slab(jnp.reshape(x_flat, (n // width, width)), target_block_bytes)
        return jnp.reshape(out2d, orig_shape)

    if n <= _SMALL_N:
        # Small ragged size: one full-extent (1, n) block — a block shape equal
        # to the full array dims is always legal; no padding, no slicing.
        out2d = _log_slab(jnp.reshape(x_flat, (1, n)), target_block_bytes)
        return jnp.reshape(out2d, orig_shape)

    # Large ragged size: kernel on the 128-aligned prefix, plain jnp.log on the
    # <128-element tail. A single output-assembly concatenate remains, which
    # replaces the previous full-array pad + trailing slice (two extra HBM
    # round trips) with one.
    tail = n % _LANE
    n_main = n - tail
    width = next(w for w in (2048, 1024, 512, 256, 128) if n_main % w == 0)
    x_main = lax.slice(x_flat, (0,), (n_main,))
    out_main = _log_slab(jnp.reshape(x_main, (n_main // width, width)),
                         target_block_bytes)
    out_tail = jnp.log(lax.slice(x_flat, (n_main,), (n,)))
    out_flat = jnp.concatenate([jnp.reshape(out_main, (-1,)), out_tail])
    return jnp.reshape(out_flat, orig_shape)


if __name__ == "__main__":
    key = jax.random.PRNGKey(0)

    # Small NCHW input consistent with the conv-net usage; strictly positive
    # so log is finite (matches typical torch.log usage).
    x = jax.random.uniform(
        key, (2, 4, 16, 16), dtype=jnp.float32, minval=0.1, maxval=2.0
    )
    y = jax.block_until_ready(log_layer(x))
    y_ref = jnp.log(x)
    assert y.shape == x.shape and y.dtype == x.dtype
    assert jnp.allclose(y, y_ref, atol=1e-6, rtol=1e-6)

    # Tiny ragged size (105 elements) exercises the full-extent (1, n) block path.
    x_odd = jax.random.uniform(
        jax.random.PRNGKey(1), (3, 5, 7), dtype=jnp.float32, minval=0.1, maxval=2.0
    )
    y_odd = jax.block_until_ready(log_layer(x_odd))
    assert y_odd.shape == x_odd.shape
    assert jnp.allclose(y_odd, jnp.log(x_odd), atol=1e-6, rtol=1e-6)

    # Larger aligned input exercises the multi-block (pipelined, multi-TC) path.
    x_big = jax.random.uniform(
        jax.random.PRNGKey(2), (8, 16, 64, 128), dtype=jnp.float32,
        minval=0.1, maxval=2.0
    )
    y_big = jax.block_until_ready(log_layer(x_big))
    assert jnp.allclose(y_big, jnp.log(x_big), atol=1e-6, rtol=1e-6)

    # Large ragged input (38423 elements) exercises the aligned-prefix + tail path.
    x_rag = jax.random.uniform(
        jax.random.PRNGKey(3), (7, 11, 499), dtype=jnp.float32, minval=0.1, maxval=2.0
    )
    y_rag = jax.block_until_ready(log_layer(x_rag))
    assert y_rag.shape == x_rag.shape
    assert jnp.allclose(y_rag, jnp.log(x_rag), atol=1e-6, rtol=1e-6)

    print("KERNEL_OK")
</pallas_src>

<mosaic_0001>
module attributes {stable_mosaic.version = 11 : i64} {
  func.func @_log_kernel(%arg0: i32, %arg1: memref<1x2048xf32, #tpu.memory_space<vmem>>, %arg2: memref<1x2048xf32, #tpu.memory_space<vmem>>) attributes {dimension_semantics = [#tpu.dimension_semantics<parallel>], iteration_bounds = array<i64: 1>, scalar_prefetch = 0 : i64, scratch_operands = 0 : i64, tpu.core_type = #tpu.core_type<tc>, window_params = [{transform_indices = @transform_0, window_bounds = array<i64: 1, 2048>}, {transform_indices = @transform_1, window_bounds = array<i64: 1, 2048>}]} {
    %c0 = arith.constant 0 : index
    %c0_0 = arith.constant 0 : index
    %0 = vector.load %arg1[%c0, %c0_0] : memref<1x2048xf32, #tpu.memory_space<vmem>>, vector<1x2048xf32>
    %1 = math.log %0 : vector<1x2048xf32>
    %c0_1 = arith.constant 0 : index
    %c0_2 = arith.constant 0 : index
    %2 = vector.load %arg2[%c0_1, %c0_2] : memref<1x2048xf32, #tpu.memory_space<vmem>>, vector<1x2048xf32>
    tpu.vector_store %arg2[%c0_1, %c0_2], %1 {strides = array<i32>} : memref<1x2048xf32, #tpu.memory_space<vmem>>, vector<1x2048xf32>,
    return
  }
  func.func @transform_0(%arg0: i32) -> (i32, i32) {
    %c0_i32 = arith.constant 0 : i32
    %c0_i32_0 = arith.constant 0 : i32
    return %arg0, %c0_i32 : i32, i32
  }
  func.func @transform_1(%arg0: i32) -> (i32, i32) {
    %c0_i32 = arith.constant 0 : i32
    %c0_i32_0 = arith.constant 0 : i32
    return %arg0, %c0_i32 : i32, i32
  }
}

</mosaic_0001>

<llo_original>
// kernel: tpu_custom_call.1
$region0: #{tpu_custom_call.1}
  #allocation0 [shape = 'u32[]', space=smem, size = 0x4, offset = 0x4, fixed_abs, tag = 'smem constant byte address 0x4 - core index']
  #allocation1 [shape = 'u32[144,128]{1,0:T(1,128)}', space=vmem, size = 0x12000, scoped, tag = 'internal scratch']
  %s0 = inlined_call_operand.hbm [shape: f32[1,2048], index: 0, kind: input, shape index: {}]
  %s1 = inlined_call_operand.hbm [shape: f32[1,2048], index: 1, kind: output, shape index: {}]
  %s2 = sld [smem:[#allocation0]]
  $region18: #{tpu_custom_call.1} parent=0
    _
  %s4 = ssub.s32 1, %s2
  %s5 = scalar_select 0, %s4, %s2
  $region1: #{tpu_custom_call.1} parent=0
    #allocation2 [shape = 'u8[8192]{0}', space=vmem, size = 0x2000, scoped, tag = 'input window, operand 0, single buffered']
    #allocation3 [shape = 's32[1]{0}', space=sflag, size = 0x4, scoped, tag = 'scoped memory for tpu_custom_call.1']
    #allocation4 [shape = 's32[1]{0}', space=sflag, size = 0x4, scoped, tag = 'scoped memory for tpu_custom_call.1']
    #allocation5 [shape = 'u8[8192]{0}', space=vmem, size = 0x2000, scoped, tag = 'output window, operand 0, single buffered']
    %6 = vsyncpa [#allocation3], 0
    %7 = vsyncpa [#allocation4], 0
    // Predicated region
    $region2: #{tpu_custom_call.1} parent=1 // pred_check
      _
    $region3: #{tpu_custom_call.1} parent=1 // pred_check_branch
      %9 = sbr.rel (0) target = $region5
    $region4: #{tpu_custom_call.1} parent=1 // pred_region
      %s11 = ssub.s32 256, 256
      %12 = vsyncadd [#allocation3], %s11
      %s14 = sshll.u32 [#allocation2], 4
      %s15 = int_to_ptr.vmem [resolvable:$true] %s14
      %17 = dma.hbm_to_vmem [thread:$0]  %s0, 256, %s15, [#allocation3]
    $region5: #{tpu_custom_call.1} parent=1 // pred_fallthru
      _
    // Predicated region
    $region6: #{tpu_custom_call.1} parent=1 // pred_check
      _
    $region7: #{tpu_custom_call.1} parent=1 // pred_check_branch
      %19 = sbr.rel (0) target = $region9
    $region8: #{tpu_custom_call.1} parent=1 // pred_region
      %20 = dma.done [#allocation3], 256
    $region9: #{tpu_custom_call.1} parent=1 // pred_fallthru
      _
    %v21 = vld [vmem:[#allocation2] sm:$0xff]
    %v22 = vld [vmem:[#allocation2 + $0x8] sm:$0xff]
    %v23 = vlog2.pop %v21
    %v24 = vmul.f32 %v23, 0.6931472
    %v25 = vlog2.pop %v22
    %v26 = vmul.f32 %v25, 0.6931472
    %27 = vst [vmem:[#allocation5] sm:$0xff] %v24
    %28 = vst [vmem:[#allocation5 + $0x8] sm:$0xff] %v26
    // Predicated region
    $region10: #{tpu_custom_call.1} parent=1 // pred_check
      _
    $region11: #{tpu_custom_call.1} parent=1 // pred_check_branch
      %30 = sbr.rel (0) target = $region13
    $region12: #{tpu_custom_call.1} parent=1 // pred_region
      %s32 = ssub.s32 256, 256
      %33 = vsyncadd [#allocation4], %s32
      %s35 = sshll.u32 [#allocation5], 4
      %s36 = int_to_ptr.vmem [resolvable:$true] %s35
      %38 = dma.vmem_to_hbm [thread:$0]  %s36, 256, %s1, [#allocation4]
    $region13: #{tpu_custom_call.1} parent=1 // pred_fallthru
      _
    // Predicated region
    $region14: #{tpu_custom_call.1} parent=1 // pred_check
      _
    $region15: #{tpu_custom_call.1} parent=1 // pred_check_branch
      %40 = sbr.rel (0) target = $region17
    $region16: #{tpu_custom_call.1} parent=1 // pred_region
      %41 = dma.done [#allocation4], 256
    $region17: #{tpu_custom_call.1} parent=1 // pred_fallthru
      _
    %42 = vsyncpa [#allocation3], 1
    %43 = vsyncpa [#allocation4], 1

</llo_original>
